<compile_context>
chip_gen: v7x
topology: tpu7x:2x2x1
jax: 0.10.0
libtpu: 0.0.40
codegen_flags: <defaults>
</compile_context>

<pallas_src>
import functools

import jax
import jax.numpy as jnp
from jax.experimental import pallas as pl
from jax.experimental.pallas import tpu as pltpu


def _round_up(x, m):
    return (x + m - 1) // m * m


def _cdiv(a, b):
    return -(-a // b)


def _lane_tiles(dout):
    """Padded output width Np and gate-weight N-slab width tn."""
    # 256-granular N feeds the v6e/v7x 256x256 MXU; 128 is enough for tiny Dout
    # (and for v5e's 128x128 MXU).
    np_pad = 128 if dout <= 128 else _round_up(dout, 256)
    # Keep Wcg fully resident while small; stream it in (Np, tn) slabs once big.
    tn = np_pad if np_pad <= 1024 else 512
    return np_pad, tn


def _batch_tile(b, np_pad):
    """Batch tile: amortize per-step overhead, minimize padding, >=2 tiles when possible."""
    tm_max = 256 if np_pad >= 4096 else 512   # keep y scratch + out tile in VMEM
    bp8 = _round_up(b, 8)
    if bp8 <= 16:
        return bp8                            # tiny batch: single (or two) small tiles
    n_tiles = max(2, _cdiv(bp8, tm_max))      # >=2 so v7x can use both TensorCores
    return _round_up(_cdiv(bp8, n_tiles), 8)


def _fused_gated_unit_kernel(a_ref, t_ref, wa_ref, wt_ref, b_ref,
                             wcg_ref, bcg_ref, out_ref, y_f32, y_bf16):
    # a_ref/t_ref : (tm, Din)  f32   activation tiles (cast to bf16 in-kernel)
    # wa_ref/wt_ref: (Din, Np) bf16  resident packed weights
    # b_ref       : (1, Np)    f32   ba + bt
    # wcg_ref     : (Np, tn)   bf16  streamed N-slab of Wcg^T
    # bcg_ref     : (1, tn)    f32
    # out_ref     : (tm, tn)
    # y_f32       : (Np//tn, tm, tn) f32  scratch (epilogue precision)
    # y_bf16      : (tm, Np)         bf16 scratch (gate matmul operand)
    n = pl.program_id(1)
    num_n, _, tn = y_f32.shape

    @pl.when(n == 0)
    def _():
        y = (jnp.dot(a_ref[...].astype(jnp.bfloat16), wa_ref[...],
                     preferred_element_type=jnp.float32)
             + jnp.dot(t_ref[...].astype(jnp.bfloat16), wt_ref[...],
                       preferred_element_type=jnp.float32)
             + b_ref[...])
        y_bf16[...] = y.astype(jnp.bfloat16)
        for s in range(num_n):                 # static unroll: (tm, Np) -> slabs
            y_f32[s] = y[:, s * tn:(s + 1) * tn]

    # ContextGating: glu(cat(y, fc(y)), 1) == y * sigmoid(fc(y)), one N-slab per step.
    g = (jnp.dot(y_bf16[...], wcg_ref[...], preferred_element_type=jnp.float32)
         + bcg_ref[...])
    out_ref[...] = (y_f32[n] * jax.nn.sigmoid(g)).astype(out_ref.dtype)


@functools.partial(jax.jit, static_argnames=("dout", "np_pad", "tn", "out_dtype"))
def _fused_gated_unit_fwd(audio, text, wa_p, wt_p, b_p, wcg_p, bcg_p,
                          *, dout, np_pad, tn, out_dtype):
    B, Din = audio.shape
    Np = np_pad
    tm = _batch_tile(B, Np)
    Bp = _round_up(B, tm)
    if Bp != B:                                # pad batch rows only when needed
        audio = jnp.pad(audio, ((0, Bp - B), (0, 0)))
        text = jnp.pad(text, ((0, Bp - B), (0, 0)))

    grid = (Bp // tm, Np // tn)

    # Rough VMEM budget: double-buffered inputs/outputs + resident weights +
    # y scratch; clamp so there is headroom on v7x's 64 MiB physical VMEM.
    out_bytes = jnp.dtype(out_dtype).itemsize
    est = (2 * (2 * Din * Np * 2)              # Wa + Wt (x2 buffers)
           + 2 * (Np * tn * 2)                 # Wcg slab (x2 buffers)
           + 2 * 2 * (Np * 4)                  # biases
           + 2 * 2 * (tm * Din * 4)            # audio + text tiles
           + 2 * (tm * tn * out_bytes)         # output tile
           + tm * Np * (4 + 2)                 # y scratch (f32 + bf16)
           + 4 * tm * tn * 4)                  # in-flight temporaries
    vmem_limit = int(min(56 * 1024 * 1024, max(32 * 1024 * 1024, 2 * est)))

    out_p = pl.pallas_call(
        _fused_gated_unit_kernel,
        out_shape=jax.ShapeDtypeStruct((Bp, Np), out_dtype),
        grid_spec=pltpu.PrefetchScalarGridSpec(
            num_scalar_prefetch=0,
            grid=grid,
            in_specs=[
                pl.BlockSpec((tm, Din), lambda i, n: (i, 0)),   # audio tile (streams)
                pl.BlockSpec((tm, Din), lambda i, n: (i, 0)),   # text tile (streams)
                pl.BlockSpec((Din, Np), lambda i, n: (0, 0)),   # Wa^T (VMEM-resident)
                pl.BlockSpec((Din, Np), lambda i, n: (0, 0)),   # Wt^T (VMEM-resident)
                pl.BlockSpec((1, Np), lambda i, n: (0, 0)),     # ba + bt
                pl.BlockSpec((Np, tn), lambda i, n: (0, n)),    # Wcg^T N-slab (streams)
                pl.BlockSpec((1, tn), lambda i, n: (0, n)),     # bcg N-slab
            ],
            out_specs=pl.BlockSpec((tm, tn), lambda i, n: (i, n)),
            scratch_shapes=[
                pltpu.VMEM((Np // tn, tm, tn), jnp.float32),    # y (epilogue precision)
                pltpu.VMEM((tm, Np), jnp.bfloat16),             # y (gate matmul operand)
            ],
        ),
        compiler_params=pltpu.CompilerParams(
            dimension_semantics=("parallel", "arbitrary"),      # batch over v7x TCs
            vmem_limit_bytes=vmem_limit,
        ),
    )(audio, text, wa_p, wt_p, b_p, wcg_p, bcg_p)

    if Bp == B and Np == dout:
        return out_p
    return out_p[:B, :dout]                    # strip batch / lane zero-padding


def make_fused_gated_unit(wa, ba, wt, bt, wcg, bcg, *, out_dtype=jnp.float32):
    """Pack FusedGatedUnit weights ONCE; return forward(audio, text) -> [B, Dout].

    wa, wt : [Dout, Din] (torch nn.Linear layout);  wcg : [Dout, Dout];
    ba, bt, bcg : [Dout].
    """
    Dout, Din = wa.shape
    Np, tn = _lane_tiles(Dout)

    wdt = jnp.bfloat16
    # One-time packing: [K, N] layout, bf16 MXU operands, zero-pad N to Np lanes.
    wa_p = jnp.zeros((Din, Np), wdt).at[:, :Dout].set(wa.T.astype(wdt))
    wt_p = jnp.zeros((Din, Np), wdt).at[:, :Dout].set(wt.T.astype(wdt))
    b_p = jnp.zeros((1, Np), jnp.float32).at[:, :Dout].set(
        (ba + bt).astype(jnp.float32)[None, :])
    wcg_p = jnp.zeros((Np, Np), wdt).at[:Dout, :Dout].set(wcg.T.astype(wdt))
    bcg_p = jnp.zeros((1, Np), jnp.float32).at[:, :Dout].set(
        bcg.astype(jnp.float32)[None, :])
    packed = jax.device_put((wa_p, wt_p, b_p, wcg_p, bcg_p))

    def forward(audio, text):
        return _fused_gated_unit_fwd(audio, text, *packed,
                                     dout=Dout, np_pad=Np, tn=tn,
                                     out_dtype=out_dtype)

    return forward


def _torch_linear_init(key, out_dim, in_dim):
    """Deterministic stand-in for nn.Linear init: uniform(-1/sqrt(in), 1/sqrt(in))."""
    kw, kb = jax.random.split(key)
    bound = 1.0 / jnp.sqrt(jnp.float32(in_dim))
    w = jax.random.uniform(kw, (out_dim, in_dim), jnp.float32, -bound, bound)
    b = jax.random.uniform(kb, (out_dim,), jnp.float32, -bound, bound)
    return w, b


if __name__ == "__main__":
    key = jax.random.PRNGKey(0)
    k_a, k_t, k_wa, k_wt, k_cg, _ = jax.random.split(key, 6)

    B, Din, Dout = 8, 32, 32   # small shapes consistent with the module

    audio = jax.random.normal(k_a, (B, Din), jnp.float32)
    text = jax.random.normal(k_t, (B, Din), jnp.float32)

    Wa, ba = _torch_linear_init(k_wa, Dout, Din)     # fc_audio
    Wt, bt = _torch_linear_init(k_wt, Dout, Din)     # fc_text
    Wcg, bcg = _torch_linear_init(k_cg, Dout, Dout)  # ContextGating.fc

    forward = make_fused_gated_unit(Wa, ba, Wt, bt, Wcg, bcg)
    out = jax.block_until_ready(forward(audio, text))
    assert out.shape == (B, Dout) and out.dtype == jnp.float32

    # --- reference 1: kernel-consistent (bf16 matmul operands, f32 accum) ---
    bf = jnp.bfloat16
    y_ref = (jnp.dot(audio.astype(bf), Wa.T.astype(bf),
                     preferred_element_type=jnp.float32)
             + jnp.dot(text.astype(bf), Wt.T.astype(bf),
                       preferred_element_type=jnp.float32)
             + (ba + bt))
    g_ref = jnp.dot(y_ref.astype(bf), Wcg.T.astype(bf),
                    preferred_element_type=jnp.float32) + bcg
    ref_bf = y_ref * jax.nn.sigmoid(g_ref)
    assert jnp.allclose(out, ref_bf, atol=1e-4, rtol=1e-4), \
        "mismatch vs bf16-consistent reference"

    # --- reference 2: full-f32 PyTorch equivalent (loose tol for bf16 matmuls) ---
    y_f32 = audio @ Wa.T + ba + text @ Wt.T + bt
    ref_f32 = y_f32 * jax.nn.sigmoid(y_f32 @ Wcg.T + bcg)
    assert jnp.allclose(out, ref_f32, atol=5e-2, rtol=5e-2), \
        "mismatch vs f32 reference"

    print("KERNEL_OK")
</pallas_src>

<mosaic_0001>
module attributes {stable_mosaic.version = 11 : i64} {
  func.func @_fused_gated_unit_kernel(%arg0: i32, %arg1: i32, %arg2: memref<8x32xf32, #tpu.memory_space<vmem>>, %arg3: memref<8x32xf32, #tpu.memory_space<vmem>>, %arg4: memref<32x128xbf16, #tpu.memory_space<vmem>>, %arg5: memref<32x128xbf16, #tpu.memory_space<vmem>>, %arg6: memref<1x128xf32, #tpu.memory_space<vmem>>, %arg7: memref<128x128xbf16, #tpu.memory_space<vmem>>, %arg8: memref<1x128xf32, #tpu.memory_space<vmem>>, %arg9: memref<8x128xf32, #tpu.memory_space<vmem>>, %arg10: memref<1x8x128xf32, #tpu.memory_space<vmem>>, %arg11: memref<8x128xbf16, #tpu.memory_space<vmem>>) attributes {dimension_semantics = [#tpu.dimension_semantics<parallel>, #tpu.dimension_semantics<arbitrary>], iteration_bounds = array<i64: 1, 1>, scalar_prefetch = 0 : i64, scratch_operands = 2 : i64, tpu.core_type = #tpu.core_type<tc>, window_params = [{transform_indices = @transform_0, window_bounds = array<i64: 8, 32>}, {transform_indices = @transform_1, window_bounds = array<i64: 8, 32>}, {pipeline_mode = #tpu.pipeline_mode<synchronous>, transform_indices = @transform_2, window_bounds = array<i64: 32, 128>}, {pipeline_mode = #tpu.pipeline_mode<synchronous>, transform_indices = @transform_3, window_bounds = array<i64: 32, 128>}, {pipeline_mode = #tpu.pipeline_mode<synchronous>, transform_indices = @transform_4, window_bounds = array<i64: 1, 128>}, {transform_indices = @transform_5, window_bounds = array<i64: 128, 128>}, {transform_indices = @transform_6, window_bounds = array<i64: 1, 128>}, {transform_indices = @transform_7, window_bounds = array<i64: 8, 128>}]} {
    %c0_i32 = arith.constant 0 : i32
    %0 = arith.cmpi eq, %arg1, %c0_i32 : i32
    %1 = arith.extui %0 : i1 to i32
    %c0_i32_0 = arith.constant 0 : i32
    %2 = arith.cmpi ne, %1, %c0_i32_0 : i32
    scf.if %2 {
      %c0_11 = arith.constant 0 : index
      %c0_12 = arith.constant 0 : index
      %19 = vector.load %arg2[%c0_11, %c0_12] : memref<8x32xf32, #tpu.memory_space<vmem>>, vector<8x32xf32>
      %20 = arith.truncf %19 : vector<8x32xf32> to vector<8x32xbf16>
      %c0_13 = arith.constant 0 : index
      %c0_14 = arith.constant 0 : index
      %21 = vector.load %arg4[%c0_13, %c0_14] : memref<32x128xbf16, #tpu.memory_space<vmem>>, vector<32x128xbf16>
      %cst_15 = arith.constant dense<0.000000e+00> : vector<8x128xf32>
      %22 = tpu.matmul %20, %21, %cst_15 {dimension_numbers = #tpu.dot_dimension_numbers<[1], [0], [0], [1], [0, 0, 1, 1], [], []>} : vector<8x32xbf16>, vector<32x128xbf16>, vector<8x128xf32> -> vector<8x128xf32>
      %c0_16 = arith.constant 0 : index
      %c0_17 = arith.constant 0 : index
      %23 = vector.load %arg3[%c0_16, %c0_17] : memref<8x32xf32, #tpu.memory_space<vmem>>, vector<8x32xf32>
      %24 = arith.truncf %23 : vector<8x32xf32> to vector<8x32xbf16>
      %c0_18 = arith.constant 0 : index
      %c0_19 = arith.constant 0 : index
      %25 = vector.load %arg5[%c0_18, %c0_19] : memref<32x128xbf16, #tpu.memory_space<vmem>>, vector<32x128xbf16>
      %cst_20 = arith.constant dense<0.000000e+00> : vector<8x128xf32>
      %26 = tpu.matmul %24, %25, %cst_20 {dimension_numbers = #tpu.dot_dimension_numbers<[1], [0], [0], [1], [0, 0, 1, 1], [], []>} : vector<8x32xbf16>, vector<32x128xbf16>, vector<8x128xf32> -> vector<8x128xf32>
      %27 = arith.addf %22, %26 : vector<8x128xf32>
      %c0_21 = arith.constant 0 : index
      %c0_22 = arith.constant 0 : index
      %28 = vector.load %arg6[%c0_21, %c0_22] : memref<1x128xf32, #tpu.memory_space<vmem>>, vector<1x128xf32>
      %29 = vector.broadcast %28 : vector<1x128xf32> to vector<8x128xf32>
      %30 = arith.addf %27, %29 : vector<8x128xf32>
      %31 = arith.truncf %30 : vector<8x128xf32> to vector<8x128xbf16>
      %c0_23 = arith.constant 0 : index
      %c0_24 = arith.constant 0 : index
      %32 = vector.load %arg11[%c0_23, %c0_24] : memref<8x128xbf16, #tpu.memory_space<vmem>>, vector<8x128xbf16>
      tpu.vector_store %arg11[%c0_23, %c0_24], %31 {strides = array<i32>} : memref<8x128xbf16, #tpu.memory_space<vmem>>, vector<8x128xbf16>,
      %c0_25 = arith.constant 0 : index
      %c0_26 = arith.constant 0 : index
      %c0_27 = arith.constant 0 : index
      %33 = vector.load %arg10[%c0_25, %c0_26, %c0_27] : memref<1x8x128xf32, #tpu.memory_space<vmem>>, vector<1x8x128xf32>
      %34 = vector.shape_cast %33 : vector<1x8x128xf32> to vector<8x128xf32>
      %35 = vector.shape_cast %30 : vector<8x128xf32> to vector<1x8x128xf32>
      tpu.vector_store %arg10[%c0_25, %c0_26, %c0_27], %35 {strides = array<i32>} : memref<1x8x128xf32, #tpu.memory_space<vmem>>, vector<1x8x128xf32>,
    } else {
    }
    %c0 = arith.constant 0 : index
    %c0_1 = arith.constant 0 : index
    %3 = vector.load %arg11[%c0, %c0_1] : memref<8x128xbf16, #tpu.memory_space<vmem>>, vector<8x128xbf16>
    %c0_2 = arith.constant 0 : index
    %c0_3 = arith.constant 0 : index
    %4 = vector.load %arg7[%c0_2, %c0_3] : memref<128x128xbf16, #tpu.memory_space<vmem>>, vector<128x128xbf16>
    %cst = arith.constant dense<0.000000e+00> : vector<8x128xf32>
    %5 = tpu.matmul %3, %4, %cst {dimension_numbers = #tpu.dot_dimension_numbers<[1], [0], [0], [1], [0, 0, 1, 1], [], []>} : vector<8x128xbf16>, vector<128x128xbf16>, vector<8x128xf32> -> vector<8x128xf32>
    %c0_4 = arith.constant 0 : index
    %c0_5 = arith.constant 0 : index
    %6 = vector.load %arg8[%c0_4, %c0_5] : memref<1x128xf32, #tpu.memory_space<vmem>>, vector<1x128xf32>
    %7 = vector.broadcast %6 : vector<1x128xf32> to vector<8x128xf32>
    %8 = arith.addf %5, %7 : vector<8x128xf32>
    %9 = arith.index_cast %arg1 : i32 to index
    %c0_6 = arith.constant 0 : index
    %c0_7 = arith.constant 0 : index
    %10 = vector.load %arg10[%9, %c0_6, %c0_7] : memref<1x8x128xf32, #tpu.memory_space<vmem>>, vector<1x8x128xf32>
    %11 = vector.shape_cast %10 : vector<1x8x128xf32> to vector<8x128xf32>
    %12 = arith.negf %8 : vector<8x128xf32>
    %13 = math.exp %12 : vector<8x128xf32>
    %cst_8 = arith.constant 1.000000e+00 : f32
    %14 = vector.broadcast %cst_8 : f32 to vector<8x128xf32>
    %15 = arith.addf %14, %13 : vector<8x128xf32>
    %16 = arith.divf %14, %15 : vector<8x128xf32>
    %17 = arith.mulf %11, %16 : vector<8x128xf32>
    %c0_9 = arith.constant 0 : index
    %c0_10 = arith.constant 0 : index
    %18 = vector.load %arg9[%c0_9, %c0_10] : memref<8x128xf32, #tpu.memory_space<vmem>>, vector<8x128xf32>
    tpu.vector_store %arg9[%c0_9, %c0_10], %17 {strides = array<i32>} : memref<8x128xf32, #tpu.memory_space<vmem>>, vector<8x128xf32>,
    return
  }
  func.func @transform_0(%arg0: i32, %arg1: i32) -> (i32, i32) {
    %c0_i32 = arith.constant 0 : i32
    %c0_i32_0 = arith.constant 0 : i32
    return %arg0, %c0_i32 : i32, i32
  }
  func.func @transform_1(%arg0: i32, %arg1: i32) -> (i32, i32) {
    %c0_i32 = arith.constant 0 : i32
    %c0_i32_0 = arith.constant 0 : i32
    return %arg0, %c0_i32 : i32, i32
  }
  func.func @transform_2(%arg0: i32, %arg1: i32) -> (i32, i32) {
    %c0_i32 = arith.constant 0 : i32
    %c0_i32_0 = arith.constant 0 : i32
    %c0_i32_1 = arith.constant 0 : i32
    return %c0_i32, %c0_i32_0 : i32, i32
  }
  func.func @transform_3(%arg0: i32, %arg1: i32) -> (i32, i32) {
    %c0_i32 = arith.constant 0 : i32
    %c0_i32_0 = arith.constant 0 : i32
    %c0_i32_1 = arith.constant 0 : i32
    return %c0_i32, %c0_i32_0 : i32, i32
  }
  func.func @transform_4(%arg0: i32, %arg1: i32) -> (i32, i32) {
    %c0_i32 = arith.constant 0 : i32
    %c0_i32_0 = arith.constant 0 : i32
    %c0_i32_1 = arith.constant 0 : i32
    return %c0_i32, %c0_i32_0 : i32, i32
  }
  func.func @transform_5(%arg0: i32, %arg1: i32) -> (i32, i32) {
    %c0_i32 = arith.constant 0 : i32
    %c0_i32_0 = arith.constant 0 : i32
    return %c0_i32, %arg1 : i32, i32
  }
  func.func @transform_6(%arg0: i32, %arg1: i32) -> (i32, i32) {
    %c0_i32 = arith.constant 0 : i32
    %c0_i32_0 = arith.constant 0 : i32
    return %c0_i32, %arg1 : i32, i32
  }
  func.func @transform_7(%arg0: i32, %arg1: i32) -> (i32, i32) {
    %c0_i32 = arith.constant 0 : i32
    return %arg0, %arg1 : i32, i32
  }
}

</mosaic_0001>

<llo_original>
// kernel: _fused_gated_unit_fwd.1
$region0: #{_fused_gated_unit_fwd.1}
  #allocation0 [shape = 'u32[]', space=smem, size = 0x4, offset = 0x4, fixed_abs, tag = 'smem constant byte address 0x4 - core index']
  #allocation1 [shape = 'u32[144,128]{1,0:T(1,128)}', space=vmem, size = 0x12000, scoped, tag = 'internal scratch']
  #allocation2 [shape = 'f32[1,8,128]{2,1,0:T(8,128)}', space=vmem, size = 0x1000, scoped, tag = 'scratch operand']
  #allocation3 [shape = 'bf16[8,128]{1,0:T(8,128)(2,1)}', space=vmem, size = 0x800, scoped, tag = 'scratch operand']
  %s0 = inlined_call_operand.hbm [shape: f32[8,32], index: 0, kind: input, shape index: {}]
  %s1 = inlined_call_operand.hbm [shape: f32[8,32], index: 1, kind: input, shape index: {}]
  %s2 = inlined_call_operand.hbm [shape: bf16[32,128], index: 2, kind: input, shape index: {}]
  %s3 = inlined_call_operand.hbm [shape: bf16[32,128], index: 3, kind: input, shape index: {}]
  %s4 = inlined_call_operand.vmem [shape: f32[1,128], index: 4, kind: input, shape index: {}]
  %s5 = inlined_call_operand.hbm [shape: bf16[128,128], index: 5, kind: input, shape index: {}]
  %s6 = inlined_call_operand.vmem [shape: f32[1,128], index: 6, kind: input, shape index: {}]
  %s7 = inlined_call_operand.hbm [shape: f32[8,128], index: 7, kind: output, shape index: {}]
  %s8 = sld [smem:[#allocation0]]
  $region62: #{_fused_gated_unit_fwd.1} parent=0
    _
  %s10 = ssub.s32 1, %s8
  %s11 = scalar_select 0, %s10, %s8
  $region1: #{_fused_gated_unit_fwd.1} parent=0
    #allocation4 [shape = 'u8[4096]{0}', space=vmem, size = 0x1000, scoped, tag = 'input window, operand 0, single buffered']
    #allocation5 [shape = 's32[1]{0}', space=sflag, size = 0x4, scoped, tag = 'scoped memory for _fused_gated_unit_fwd.1']
    #allocation6 [shape = 's32[1]{0}', space=sflag, size = 0x4, scoped, tag = 'scoped memory for _fused_gated_unit_fwd.1']
    #allocation7 [shape = 'u8[4096]{0}', space=vmem, size = 0x1000, scoped, tag = 'input window, operand 1, single buffered']
    #allocation8 [shape = 's32[1]{0}', space=sflag, size = 0x4, scoped, tag = 'scoped memory for _fused_gated_unit_fwd.1']
    #allocation9 [shape = 'u8[8192]{0}', space=vmem, size = 0x2000, scoped, tag = 'input window, operand 2, single buffered']
    #allocation10 [shape = 'u8[8192]{0}', space=vmem, size = 0x2000, scoped, tag = 'input window, operand 3, single buffered']
    #allocation11 [shape = 's32[1]{0}', space=sflag, size = 0x4, scoped, tag = 'scoped memory for _fused_gated_unit_fwd.1']
    #allocation12 [shape = 'u8[32768]{0}', space=vmem, size = 0x8000, scoped, tag = 'input window, operand 5, single buffered']
    #allocation13 [shape = 'u8[4096]{0}', space=vmem, size = 0x1000, scoped, tag = 'output window, operand 0, single buffered']
    %12 = vsyncpa [#allocation5], 0
    %13 = vsyncpa [#allocation8], 0
    %14 = vsyncpa [#allocation11], 0
    %15 = vsyncpa [#allocation6], 0
    // Predicated region
    $region2: #{_fused_gated_unit_fwd.1} parent=1 // pred_check
      _
    $region3: #{_fused_gated_unit_fwd.1} parent=1 // pred_check_branch
      %17 = sbr.rel (0) target = $region5
    $region4: #{_fused_gated_unit_fwd.1} parent=1 // pred_region
      %s19 = ssub.s32 128, 128
      %20 = vsyncadd [#allocation5], %s19
      %s22 = sshll.u32 [#allocation4], 4
      %s23 = int_to_ptr.vmem [resolvable:$true] %s22
      %25 = dma.hbm_to_vmem [thread:$0]  %s0, 128, %s23, [#allocation5]
    $region5: #{_fused_gated_unit_fwd.1} parent=1 // pred_fallthru
      _
    // Predicated region
    $region6: #{_fused_gated_unit_fwd.1} parent=1 // pred_check
      _
    $region7: #{_fused_gated_unit_fwd.1} parent=1 // pred_check_branch
      %27 = sbr.rel (0) target = $region9
    $region8: #{_fused_gated_unit_fwd.1} parent=1 // pred_region
      %s29 = ssub.s32 128, 128
      %30 = vsyncadd [#allocation8], %s29
      %s32 = sshll.u32 [#allocation7], 4
      %s33 = int_to_ptr.vmem [resolvable:$true] %s32
      %35 = dma.hbm_to_vmem [thread:$0]  %s1, 128, %s33, [#allocation8]
    $region9: #{_fused_gated_unit_fwd.1} parent=1 // pred_fallthru
      _
    // Predicated region
    $region10: #{_fused_gated_unit_fwd.1} parent=1 // pred_check
      _
    $region11: #{_fused_gated_unit_fwd.1} parent=1 // pred_check_branch
      %37 = sbr.rel (0) target = $region13
    $region12: #{_fused_gated_unit_fwd.1} parent=1 // pred_region
      %s39 = ssub.s32 256, 256
      %40 = vsyncadd [#allocation8], %s39
      %s41 = sshll.u32 [#allocation9], 4
      %s42 = int_to_ptr.vmem [resolvable:$true] %s41
      %47 = dma.hbm_to_vmem [thread:$0]  %s2, 256, %s42, [#allocation8], 64, 64, 4
    $region13: #{_fused_gated_unit_fwd.1} parent=1 // pred_fallthru
      _
    // Predicated region
    $region14: #{_fused_gated_unit_fwd.1} parent=1 // pred_check
      _
    $region15: #{_fused_gated_unit_fwd.1} parent=1 // pred_check_branch
      %49 = sbr.rel (0) target = $region17
    $region16: #{_fused_gated_unit_fwd.1} parent=1 // pred_region
      %s51 = ssub.s32 256, 256
      %52 = vsyncadd [#allocation11], %s51
      %s53 = sshll.u32 [#allocation10], 4
      %s54 = int_to_ptr.vmem [resolvable:$true] %s53
      %59 = dma.hbm_to_vmem [thread:$0]  %s3, 256, %s54, [#allocation11], 64, 64, 4
    $region17: #{_fused_gated_unit_fwd.1} parent=1 // pred_fallthru
      _
    // Predicated region
    $region18: #{_fused_gated_unit_fwd.1} parent=1 // pred_check
      _
    $region19: #{_fused_gated_unit_fwd.1} parent=1 // pred_check_branch
      %61 = sbr.rel (0) target = $region21
    $region20: #{_fused_gated_unit_fwd.1} parent=1 // pred_region
      _
    $region21: #{_fused_gated_unit_fwd.1} parent=1 // pred_fallthru
      _
    // Predicated region
    $region22: #{_fused_gated_unit_fwd.1} parent=1 // pred_check
      _
    $region23: #{_fused_gated_unit_fwd.1} parent=1 // pred_check_branch
      %63 = sbr.rel (0) target = $region25
    $region24: #{_fused_gated_unit_fwd.1} parent=1 // pred_region
      %s65 = ssub.s32 1024, 1024
      %66 = vsyncadd [#allocation11], %s65
      %s67 = sshll.u32 [#allocation12], 4
      %s68 = int_to_ptr.vmem [resolvable:$true] %s67
      %73 = dma.hbm_to_vmem [thread:$0]  %s5, 1024, %s68, [#allocation11], 64, 64, 4
    $region25: #{_fused_gated_unit_fwd.1} parent=1 // pred_fallthru
      _
    // Predicated region
    $region26: #{_fused_gated_unit_fwd.1} parent=1 // pred_check
      _
    $region27: #{_fused_gated_unit_fwd.1} parent=1 // pred_check_branch
      %75 = sbr.rel (0) target = $region29
    $region28: #{_fused_gated_unit_fwd.1} parent=1 // pred_region
      _
    $region29: #{_fused_gated_unit_fwd.1} parent=1 // pred_fallthru
      _
    // Predicated region
    $region30: #{_fused_gated_unit_fwd.1} parent=1 // pred_check
      _
    $region31: #{_fused_gated_unit_fwd.1} parent=1 // pred_check_branch
      %77 = sbr.rel (0) target = $region33
    $region32: #{_fused_gated_unit_fwd.1} parent=1 // pred_region
      %78 = dma.done [#allocation5], 128
    $region33: #{_fused_gated_unit_fwd.1} parent=1 // pred_fallthru
      _
    // Predicated region
    $region34: #{_fused_gated_unit_fwd.1} parent=1 // pred_check
      _
    $region35: #{_fused_gated_unit_fwd.1} parent=1 // pred_check_branch
      %80 = sbr.rel (0) target = $region37
    $region36: #{_fused_gated_unit_fwd.1} parent=1 // pred_region
      %81 = dma.done [#allocation8], 128
    $region37: #{_fused_gated_unit_fwd.1} parent=1 // pred_fallthru
      _
    // Predicated region
    $region38: #{_fused_gated_unit_fwd.1} parent=1 // pred_check
      _
    $region39: #{_fused_gated_unit_fwd.1} parent=1 // pred_check_branch
      %83 = sbr.rel (0) target = $region41
    $region40: #{_fused_gated_unit_fwd.1} parent=1 // pred_region
      %84 = dma.done [#allocation8], 256
    $region41: #{_fused_gated_unit_fwd.1} parent=1 // pred_fallthru
      _
    // Predicated region
    $region42: #{_fused_gated_unit_fwd.1} parent=1 // pred_check
      _
    $region43: #{_fused_gated_unit_fwd.1} parent=1 // pred_check_branch
      %86 = sbr.rel (0) target = $region45
    $region44: #{_fused_gated_unit_fwd.1} parent=1 // pred_region
      %87 = dma.done [#allocation11], 256
    $region45: #{_fused_gated_unit_fwd.1} parent=1 // pred_fallthru
      _
    // Predicated region
    $region46: #{_fused_gated_unit_fwd.1} parent=1 // pred_check
      _
    $region47: #{_fused_gated_unit_fwd.1} parent=1 // pred_check_branch
      %89 = sbr.rel (0) target = $region49
    $region48: #{_fused_gated_unit_fwd.1} parent=1 // pred_region
      %90 = dma.done [#allocation11], 1024
    $region49: #{_fused_gated_unit_fwd.1} parent=1 // pred_fallthru
      _
    %p92 = scmp.eq.s32.totalorder 0, 0
    // Predicated region
    $region50: #{_fused_gated_unit_fwd.1} parent=1 // pred_check
      %p93 = pneg %p92
    $region51: #{_fused_gated_unit_fwd.1} parent=1 // pred_check_branch
      %95 = sbr.rel (%p93) target = $region53
    $region52: #{_fused_gated_unit_fwd.1} parent=1 // pred_region
      %v96 = vld [vmem:[#allocation4] sm:$0xff]
      %v97 = vpack.c.bf16 %v96, %v96
      %v98 = vld [vmem:[#allocation9] sm:$0xf]
      %v99 = vld [vmem:[#allocation9 + $0x4] sm:$0xf]
      %v100 = vld [vmem:[#allocation9 + $0x8] sm:$0xf]
      %v101 = vld [vmem:[#allocation9 + $0xc] sm:$0xf]
      %v102 = vld [vmem:[#allocation7] sm:$0xff]
      %v103 = vpack.c.bf16 %v102, %v102
      %v104 = vld [vmem:[#allocation10] sm:$0xf]
      %v105 = vld [vmem:[#allocation10 + $0x4] sm:$0xf]
      %v106 = vld [vmem:[#allocation10 + $0x8] sm:$0xf]
      %v107 = vld [vmem:[#allocation10 + $0xc] sm:$0xf]
      %v112 = vunpack.c.l.b16 %v104
      %v113 = vunpack.c.l.b16 %v105
      %v114 = vunpack.c.l.b16 %v106
      %v115 = vunpack.c.l.b16 %v107
      %v116 = vpack.c.b16 %v113, %v112
      %v117 = vpack.c.b16 %v115, %v114
      %vm120 = vcmask 261120
      %v122 = vsel %vm120, %v103, 0
      %124 = vmatprep.subr.bf16.mxu0 0
      %125 = vmatpush1.bf16.msra.mxu0 %v116
      %126 = vmatprep.subr.bf16.mxu0 0
      %127 = vmatpush1.bf16.msra.mxu0 %v117
      %128 = vmatprep.subr.bf16.mxu0 0
      %129 = vmatpush1.bf16.msra.mxu0 0
      %130 = vmatprep.subr.bf16.mxu0 0
      %131 = vmatpush1.bf16.msra.mxu0 0
      %132 = vmatprep.subr.bf16.mxu0 0
      %133 = vmatpush1.bf16.msra.mxu0 0
      %134 = vmatprep.subr.bf16.mxu0 0
      %135 = vmatpush1.bf16.msra.mxu0 0
      %136 = vmatprep.subr.bf16.mxu0 0
      %137 = vmatpush1.bf16.msra.mxu0 0
      %138 = vmatprep.subr.bf16.mxu0 0
      %139 = vmatpush1.bf16.msra.mxu0 0
      %140 = vmatprep.subr.bf16.mxu0 0
      %141 = vmatpush1.bf16.msra.mxu0 0
      %142 = vmatprep.subr.bf16.mxu0 0
      %143 = vmatpush1.bf16.msra.mxu0 0
      %144 = vmatprep.subr.bf16.mxu0 0
      %145 = vmatpush1.bf16.msra.mxu0 0
      %146 = vmatprep.subr.bf16.mxu0 0
      %147 = vmatpush1.bf16.msra.mxu0 0
      %148 = vmatprep.subr.bf16.mxu0 0
      %149 = vmatpush1.bf16.msra.mxu0 0
      %150 = vmatprep.subr.bf16.mxu0 0
      %151 = vmatpush1.bf16.msra.mxu0 0
      %152 = vmatprep.subr.bf16.mxu0 0
      %153 = vmatpush1.bf16.msra.mxu0 0
      %154 = vmatprep.subr.bf16.mxu0 0
      %155 = vmatpush1.bf16.msra.mxu0 0
      %156 = vmatprep.mubr.bf16.mxu0 0
      %157 = vmatmul.mubr.bf16.gmra.mrb[0].mxu0 %v122
      %v158 = vpop.f32.mrb[0].mxu0
      %v159 = vadd.f32 0.0, %v158
      %v160 = vpop.f32.mrb[0].mxu0
      %v161 = vpop.f32.mrb[0].mxu0
      %v162 = vpop.f32.mrb[0].mxu0
      %163 = vdwg.mxu0
      %v168 = vunpack.c.l.b16 %v98
      %v169 = vunpack.c.l.b16 %v99
      %v170 = vunpack.c.l.b16 %v100
      %v171 = vunpack.c.l.b16 %v101
      %v172 = vpack.c.b16 %v169, %v168
      %v173 = vpack.c.b16 %v171, %v170
      %v177 = vsel %vm120, %v97, 0
      %179 = vmatprep.subr.bf16.mxu0 0
      %180 = vmatpush1.bf16.msra.mxu0 %v172
      %181 = vmatprep.subr.bf16.mxu0 0
      %182 = vmatpush1.bf16.msra.mxu0 %v173
      %183 = vmatprep.subr.bf16.mxu0 0
      %184 = vmatpush1.bf16.msra.mxu0 0
      %185 = vmatprep.subr.bf16.mxu0 0
      %186 = vmatpush1.bf16.msra.mxu0 0
      %187 = vmatprep.subr.bf16.mxu0 0
      %188 = vmatpush1.bf16.msra.mxu0 0
      %189 = vmatprep.subr.bf16.mxu0 0
      %190 = vmatpush1.bf16.msra.mxu0 0
      %191 = vmatprep.subr.bf16.mxu0 0
      %192 = vmatpush1.bf16.msra.mxu0 0
      %193 = vmatprep.subr.bf16.mxu0 0
      %194 = vmatpush1.bf16.msra.mxu0 0
      %195 = vmatprep.subr.bf16.mxu0 0
      %196 = vmatpush1.bf16.msra.mxu0 0
      %197 = vmatprep.subr.bf16.mxu0 0
      %198 = vmatpush1.bf16.msra.mxu0 0
      %199 = vmatprep.subr.bf16.mxu0 0
      %200 = vmatpush1.bf16.msra.mxu0 0
      %201 = vmatprep.subr.bf16.mxu0 0
      %202 = vmatpush1.bf16.msra.mxu0 0
      %203 = vmatprep.subr.bf16.mxu0 0
      %204 = vmatpush1.bf16.msra.mxu0 0
      %205 = vmatprep.subr.bf16.mxu0 0
      %206 = vmatpush1.bf16.msra.mxu0 0
      %207 = vmatprep.subr.bf16.mxu0 0
      %208 = vmatpush1.bf16.msra.mxu0 0
      %209 = vmatprep.subr.bf16.mxu0 0
      %210 = vmatpush1.bf16.msra.mxu0 0
      %211 = vmatprep.mubr.bf16.mxu0 0
      %212 = vmatmul.mubr.bf16.gmra.mrb[0].mxu0 %v177
      %v213 = vpop.f32.mrb[0].mxu0
      %v214 = vadd.f32 %v159, %v213
      %v215 = vpop.f32.mrb[0].mxu0
      %v216 = vpop.f32.mrb[0].mxu0
      %v217 = vpop.f32.mrb[0].mxu0
      %218 = vdwg.mxu0
      %v219 = vld [vmem:[%s4] sm:$0x1]
      %v221 = vlaneseq
      %v222 = vshrl.u32 %v221, 7
      %v223 = vsub.s32 0, %v222
      %v224 = vrot.slane %v219, %v223
      %v226 = vadd.f32 %v214, %v224
      %v227 = vpack.c.bf16 %v226, %v226
      %228 = vst [vmem:[#allocation3] sm:$0xf] %v227
      %229 = vst [vmem:[#allocation2] sm:$0xff] %v226
    $region53: #{_fused_gated_unit_fwd.1} parent=1 // pred_fallthru
      _
    %v230 = vld [vmem:[#allocation3] sm:$0xf]
    %v231 = vld [vmem:[#allocation12] sm:$0xf]
    %v232 = vld [vmem:[#allocation12 + $0x4] sm:$0xf]
    %v233 = vld [vmem:[#allocation12 + $0x8] sm:$0xf]
    %v234 = vld [vmem:[#allocation12 + $0xc] sm:$0xf]
    %v235 = vld [vmem:[#allocation12 + $0x10] sm:$0xf]
    %v236 = vld [vmem:[#allocation12 + $0x14] sm:$0xf]
    %v237 = vld [vmem:[#allocation12 + $0x18] sm:$0xf]
    %v238 = vld [vmem:[#allocation12 + $0x1c] sm:$0xf]
    %v239 = vld [vmem:[#allocation12 + $0x20] sm:$0xf]
    %v240 = vld [vmem:[#allocation12 + $0x24] sm:$0xf]
    %v241 = vld [vmem:[#allocation12 + $0x28] sm:$0xf]
    %v242 = vld [vmem:[#allocation12 + $0x2c] sm:$0xf]
    %v243 = vld [vmem:[#allocation12 + $0x30] sm:$0xf]
    %v244 = vld [vmem:[#allocation12 + $0x34] sm:$0xf]
    %v245 = vld [vmem:[#allocation12 + $0x38] sm:$0xf]
    %v246 = vld [vmem:[#allocation12 + $0x3c] sm:$0xf]
    %v247 = vld [vmem:[%s6] sm:$0x1]
    %v249 = vlaneseq
    %v250 = vshrl.u32 %v249, 7
    %v251 = vsub.s32 0, %v250
    %v252 = vrot.slane %v247, %v251
    %v270 = vunpack.c.l.b16 %v231
    %v271 = vunpack.c.l.b16 %v232
    %v272 = vunpack.c.l.b16 %v233
    %v273 = vunpack.c.l.b16 %v234
    %v274 = vunpack.c.l.b16 %v235
    %v275 = vunpack.c.l.b16 %v236
    %v276 = vunpack.c.l.b16 %v237
    %v277 = vunpack.c.l.b16 %v238
    %v278 = vunpack.c.l.b16 %v239
    %v279 = vunpack.c.l.b16 %v240
    %v280 = vunpack.c.l.b16 %v241
    %v281 = vunpack.c.l.b16 %v242
    %v282 = vunpack.c.l.b16 %v243
    %v283 = vunpack.c.l.b16 %v244
    %v284 = vunpack.c.l.b16 %v245
    %v285 = vunpack.c.l.b16 %v246
    %v286 = vpack.c.b16 %v271, %v270
    %v287 = vpack.c.b16 %v273, %v272
    %v288 = vpack.c.b16 %v275, %v274
    %v289 = vpack.c.b16 %v277, %v276
    %v290 = vpack.c.b16 %v279, %v278
    %v291 = vpack.c.b16 %v281, %v280
    %v292 = vpack.c.b16 %v283, %v282
    %v293 = vpack.c.b16 %v285, %v284
    %302 = vmatprep.subr.bf16.mxu0 0
    %303 = vmatpush1.bf16.msra.mxu0 %v286
    %304 = vmatprep.subr.bf16.mxu0 0
    %305 = vmatpush1.bf16.msra.mxu0 %v287
    %306 = vmatprep.subr.bf16.mxu0 0
    %307 = vmatpush1.bf16.msra.mxu0 %v288
    %308 = vmatprep.subr.bf16.mxu0 0
    %309 = vmatpush1.bf16.msra.mxu0 %v289
    %310 = vmatprep.subr.bf16.mxu0 0
    %311 = vmatpush1.bf16.msra.mxu0 %v290
    %312 = vmatprep.subr.bf16.mxu0 0
    %313 = vmatpush1.bf16.msra.mxu0 %v291
    %314 = vmatprep.subr.bf16.mxu0 0
    %315 = vmatpush1.bf16.msra.mxu0 %v292
    %316 = vmatprep.subr.bf16.mxu0 0
    %317 = vmatpush1.bf16.msra.mxu0 %v293
    %318 = vmatprep.subr.bf16.mxu0 0
    %319 = vmatpush1.bf16.msra.mxu0 0
    %320 = vmatprep.subr.bf16.mxu0 0
    %321 = vmatpush1.bf16.msra.mxu0 0
    %322 = vmatprep.subr.bf16.mxu0 0
    %323 = vmatpush1.bf16.msra.mxu0 0
    %324 = vmatprep.subr.bf16.mxu0 0
    %325 = vmatpush1.bf16.msra.mxu0 0
    %326 = vmatprep.subr.bf16.mxu0 0
    %327 = vmatpush1.bf16.msra.mxu0 0
    %328 = vmatprep.subr.bf16.mxu0 0
    %329 = vmatpush1.bf16.msra.mxu0 0
    %330 = vmatprep.subr.bf16.mxu0 0
    %331 = vmatpush1.bf16.msra.mxu0 0
    %332 = vmatprep.subr.bf16.mxu0 0
    %333 = vmatpush1.bf16.msra.mxu0 0
    %334 = vmatprep.mubr.bf16.mxu0 0
    %335 = vmatmul.mubr.bf16.gmra.mrb[0].mxu0 %v230
    %v336 = vpop.f32.mrb[0].mxu0
    %v337 = vadd.f32 %v252, %v336
    %v338 = vpop.f32.mrb[0].mxu0
    %v339 = vpop.f32.mrb[0].mxu0
    %v340 = vpop.f32.mrb[0].mxu0
    %341 = vdwg.mxu0
    %s342 = smul.u32 0, 8
    %s343 = scalar_lea.vmem [#allocation2], %s342
    %v344 = vld [vmem:[%s343] sm:$0xff]
    %v345 = vxor.u32 %v337, 2147483648
    %v346 = vmul.f32 %v345, 1.442695
    %v347 = vpow.pop %v346
    %v348 = vadd.f32 %v347, 1.0
    %v349 = vrcp.pop %v348
    %v350 = vmul.f32 1.0, %v349
    %v351 = vmul.f32 %v344, %v350
    %352 = vst [vmem:[#allocation13] sm:$0xff] %v351
    // Predicated region
    $region54: #{_fused_gated_unit_fwd.1} parent=1 // pred_check
      _
    $region55: #{_fused_gated_unit_fwd.1} parent=1 // pred_check_branch
      %354 = sbr.rel (0) target = $region57
    $region56: #{_fused_gated_unit_fwd.1} parent=1 // pred_region
      %s356 = ssub.s32 128, 128
      %357 = vsyncadd [#allocation6], %s356
      %s359 = sshll.u32 [#allocation13], 4
      %s360 = int_to_ptr.vmem [resolvable:$true] %s359
      %362 = dma.vmem_to_hbm [thread:$0]  %s360, 128, %s7, [#allocation6]
    $region57: #{_fused_gated_unit_fwd.1} parent=1 // pred_fallthru
      _
    // Predicated region
    $region58: #{_fused_gated_unit_fwd.1} parent=1 // pred_check
      _
    $region59: #{_fused_gated_unit_fwd.1} parent=1 // pred_check_branch
      %364 = sbr.rel (0) target = $region61
    $region60: #{_fused_gated_unit_fwd.1} parent=1 // pred_region
      %365 = dma.done [#allocation6], 128
    $region61: #{_fused_gated_unit_fwd.1} parent=1 // pred_fallthru
      _
    %366 = vsyncpa [#allocation5], 1
    %367 = vsyncpa [#allocation8], 1
    %368 = vsyncpa [#allocation11], 1
    %369 = vsyncpa [#allocation6], 1

</llo_original>
